<compile_context>
chip_gen: v7x
topology: tpu7x:2x2x1
jax: 0.10.0
libtpu: 0.0.40
codegen_flags: <defaults>
</compile_context>

<pallas_src>
import jax
import jax.numpy as jnp
from jax import lax
from jax.experimental import pallas as pl
from jax.experimental.pallas import tpu as pltpu


def _round_up(x: int, m: int) -> int:
    return ((x + m - 1) // m) * m


def _cdiv(a: int, b: int) -> int:
    return -(-a // b)


# Conservative per-element VMEM accounting:
#   2 inputs x 2 pipeline buffers (native dtype) + ~6 live f32 (tb, tc) temps.
_LIVE_F32_TEMPS = 6
# Footprint budget safe on every generation (v5e's 16 MiB default scoped VMEM
# is the tightest); vmem_limit_bytes gives extra headroom for pipeline state.
_VMEM_BUDGET_BYTES = 12 * 1024 * 1024
_VMEM_LIMIT_BYTES = 32 * 1024 * 1024

# Finite "minus infinity" so masked lanes never create inf/nan in exp / max.
_NEG_BIG = -1e30


def _row_lse(x):
    """Stabilized logsumexp over the last axis, keepdims. x: (tb, tc) f32."""
    m = jnp.max(x, axis=-1, keepdims=True)
    return m + jnp.log(jnp.sum(jnp.exp(x - m), axis=-1, keepdims=True))


def _make_row_kernel(inv_t: float, tb: int, n_batch: int):
    """Single-axis grid over row blocks; full class axis per block."""
    needs_row_mask = (n_batch % tb) != 0

    def kernel(g_ref, l_ref, out_ref):
        g = g_ref[...].astype(jnp.float32) * inv_t          # g_logits / T
        l = l_ref[...].astype(jnp.float32) * inv_t          # l_avg_logits / T
        if needs_row_mask:
            rows = pl.program_id(0) * tb + lax.broadcasted_iota(
                jnp.int32, (tb, 1), 0)
            rvalid = rows < n_batch
            # Zero rows give identical LSEs for g, l and y -> contribute 0.
            g = jnp.where(rvalid, g, 0.0)
            l = jnp.where(rvalid, l, 0.0)
        y = 0.5 * (g + l)                                    # (0.5*(g+l)) / T

        # Per-row contribution: LSE(g/T) + LSE(l/T) - 2*LSE(y/T).
        contrib = _row_lse(g) + _row_lse(l) - 2.0 * _row_lse(y)   # (tb, 1)
        out_ref[...] = jnp.sum(contrib, keepdims=True)[None]      # (1, 1, 1)

    return kernel


def _make_tiled_kernel(inv_t: float, tb: int, tc: int,
                       n_batch: int, n_classes: int):
    """Two-axis grid (row blocks x class blocks) with online LSE in scratch."""
    needs_row_mask = (n_batch % tb) != 0
    needs_col_mask = (n_classes % tc) != 0

    def kernel(g_ref, l_ref, out_ref, m_ref, s_ref):
        ci = pl.program_id(1)

        @pl.when(ci == 0)
        def _():
            m_ref[...] = jnp.full_like(m_ref, _NEG_BIG)
            s_ref[...] = jnp.zeros_like(s_ref)

        g = g_ref[...].astype(jnp.float32) * inv_t
        l = l_ref[...].astype(jnp.float32) * inv_t
        if needs_row_mask:
            rows = pl.program_id(0) * tb + lax.broadcasted_iota(
                jnp.int32, (tb, 1), 0)
            rvalid = rows < n_batch
            g = jnp.where(rvalid, g, 0.0)
            l = jnp.where(rvalid, l, 0.0)
        if needs_col_mask:
            cols = ci * tc + lax.broadcasted_iota(jnp.int32, (1, tc), 1)
            cvalid = cols < n_classes
            g = jnp.where(cvalid, g, _NEG_BIG)
            l = jnp.where(cvalid, l, _NEG_BIG)
        y = 0.5 * (g + l)

        # Online (flash-style) logsumexp update for g, l and y.
        for k, x in enumerate((g, l, y)):
            m_old = m_ref[k]                                       # (tb, 1)
            s_old = s_ref[k]
            m_new = jnp.maximum(m_old, jnp.max(x, axis=-1, keepdims=True))
            s_new = s_old * jnp.exp(m_old - m_new) + jnp.sum(
                jnp.exp(x - m_new), axis=-1, keepdims=True)
            m_ref[k] = m_new
            s_ref[k] = s_new

        @pl.when(ci == pl.num_programs(1) - 1)
        def _():
            lse_g = m_ref[0] + jnp.log(s_ref[0])
            lse_l = m_ref[1] + jnp.log(s_ref[1])
            lse_y = m_ref[2] + jnp.log(s_ref[2])
            contrib = lse_g + lse_l - 2.0 * lse_y                  # (tb, 1)
            out_ref[...] = jnp.sum(contrib, keepdims=True)[None]   # (1, 1, 1)

    return kernel


def distill_loss(g_logits: jax.Array,
                 l_avg_logits: jax.Array,
                 temperature: float,
                 *,
                 block_rows: int | None = None,
                 block_classes: int | None = None) -> jax.Array:
    """g_logits, l_avg_logits: (B, C); returns scalar f32 loss."""
    assert g_logits.shape == l_avg_logits.shape and g_logits.ndim == 2
    n_batch, n_classes = g_logits.shape
    itemsize = jnp.dtype(g_logits.dtype).itemsize
    per_elem = 2 * 2 * itemsize + _LIVE_F32_TEMPS * 4
    inv_t = 1.0 / float(temperature)

    # Class-axis tiling for vocab-sized C (or when the caller forces it).
    forced_class_tiling = (
        block_classes is not None
        and _round_up(block_classes, 128) < _round_up(n_classes, 128))
    use_class_tiling = (forced_class_tiling
                        or 8 * n_classes * per_elem > _VMEM_BUDGET_BYTES)

    def pick_tb(cols: int) -> int:
        if block_rows is not None:
            tb = max(8, _round_up(block_rows, 8))
        else:
            tb = max(8, (_VMEM_BUDGET_BYTES // max(cols * per_elem, 1)) // 8 * 8)
            # Keep >= 2 row blocks so both v7x TensorCores get work.
            if n_batch > 8:
                tb = min(tb, _round_up(_cdiv(n_batch, 2), 8))
        return min(tb, _round_up(n_batch, 8))

    if not use_class_tiling:
        tb = pick_tb(n_classes)
        grid_r = _cdiv(n_batch, tb)
        kernel = _make_row_kernel(inv_t, tb, n_batch)
        partials = pl.pallas_call(
            kernel,
            out_shape=jax.ShapeDtypeStruct((grid_r, 1, 1), jnp.float32),
            grid_spec=pltpu.PrefetchScalarGridSpec(
                num_scalar_prefetch=0,
                grid=(grid_r,),
                in_specs=[
                    pl.BlockSpec((tb, n_classes), lambda b: (b, 0)),
                    pl.BlockSpec((tb, n_classes), lambda b: (b, 0)),
                ],
                out_specs=pl.BlockSpec((1, 1, 1), lambda b: (b, 0, 0)),
            ),
            compiler_params=pltpu.CompilerParams(
                dimension_semantics=("parallel",),
                vmem_limit_bytes=_VMEM_LIMIT_BYTES),
        )(g_logits, l_avg_logits)
    else:
        if block_classes is not None:
            tc = min(_round_up(block_classes, 128), _round_up(n_classes, 128))
        else:
            tc = min(_round_up(n_classes, 128), 1024)
        tb = pick_tb(tc)
        grid_r = _cdiv(n_batch, tb)
        grid_c = _cdiv(n_classes, tc)
        kernel = _make_tiled_kernel(inv_t, tb, tc, n_batch, n_classes)
        partials = pl.pallas_call(
            kernel,
            out_shape=jax.ShapeDtypeStruct((grid_r, 1, 1), jnp.float32),
            grid_spec=pltpu.PrefetchScalarGridSpec(
                num_scalar_prefetch=0,
                grid=(grid_r, grid_c),
                in_specs=[
                    pl.BlockSpec((tb, tc), lambda r, c: (r, c)),
                    pl.BlockSpec((tb, tc), lambda r, c: (r, c)),
                ],
                out_specs=pl.BlockSpec((1, 1, 1), lambda r, c: (r, 0, 0)),
                scratch_shapes=[
                    pltpu.VMEM((3, tb, 1), jnp.float32),   # running max (g,l,y)
                    pltpu.VMEM((3, tb, 1), jnp.float32),   # running sum (g,l,y)
                ],
            ),
            compiler_params=pltpu.CompilerParams(
                dimension_semantics=("parallel", "arbitrary"),
                vmem_limit_bytes=_VMEM_LIMIT_BYTES),
        )(g_logits, l_avg_logits)

    # 'batchmean' divides by the batch size; T^2 from the KLDivLoss definition.
    scale = (float(temperature) ** 2) / n_batch
    return jnp.sum(partials) * scale


def distill_loss_ref(g_logits, l_avg_logits, temperature):
    """Pure-JAX reference mirroring the PyTorch DistillLoss forward."""
    t = float(temperature)
    n_batch = g_logits.shape[0]
    y = 0.5 * (g_logits + l_avg_logits)

    def kld(inp, tgt):
        log_q = jax.nn.log_softmax(inp / t, axis=-1)
        p = jax.nn.softmax(tgt / t, axis=-1)
        return jnp.sum(p * (jnp.log(p) - log_q)) / n_batch * t * t

    return kld(l_avg_logits, y) + kld(g_logits, y)


if __name__ == "__main__":
    key = jax.random.PRNGKey(0)
    k1, k2, k3, k4, k5, k6 = jax.random.split(key, 6)

    # 1) Tiny classification-style logits: single row-tile path + ragged-row mask.
    B1, C1, T1 = 4, 32, 2.0
    g1 = jax.random.normal(k1, (B1, C1), jnp.float32)
    l1 = jax.random.normal(k2, (B1, C1), jnp.float32)
    out1 = jax.block_until_ready(distill_loss(g1, l1, T1))
    ref1 = distill_loss_ref(g1, l1, T1)
    assert jnp.allclose(out1, ref1, atol=1e-4, rtol=1e-4), (out1, ref1)

    # 2) Multi-row-block path: default tb is capped so the grid has >= 2 steps,
    #    with an in-kernel masked ragged row tail (no jnp.pad HBM copy).
    B2, C2, T2 = 20, 200, 4.0
    g2 = jax.random.normal(k3, (B2, C2), jnp.float32)
    l2 = jax.random.normal(k4, (B2, C2), jnp.float32)
    out2 = jax.block_until_ready(distill_loss(g2, l2, T2))
    ref2 = distill_loss_ref(g2, l2, T2)
    assert jnp.allclose(out2, ref2, atol=1e-4, rtol=1e-4), (out2, ref2)

    # 3) Class-tiled (online-LSE) path with ragged row AND class tails.
    B3, C3, T3 = 12, 200, 3.0
    g3 = jax.random.normal(k5, (B3, C3), jnp.float32)
    l3 = jax.random.normal(k6, (B3, C3), jnp.float32)
    out3 = jax.block_until_ready(
        distill_loss(g3, l3, T3, block_rows=8, block_classes=128))
    ref3 = distill_loss_ref(g3, l3, T3)
    assert jnp.allclose(out3, ref3, atol=1e-4, rtol=1e-4), (out3, ref3)

    print("KERNEL_OK")
</pallas_src>

<mosaic_0001>
module attributes {stable_mosaic.version = 11 : i64} {
  func.func @kernel(%arg0: i32, %arg1: memref<8x32xf32, #tpu.memory_space<vmem>>, %arg2: memref<8x32xf32, #tpu.memory_space<vmem>>, %arg3: memref<1x1x1xf32, #tpu.memory_space<vmem>>) attributes {dimension_semantics = [#tpu.dimension_semantics<parallel>], iteration_bounds = array<i64: 1>, scalar_prefetch = 0 : i64, scratch_operands = 0 : i64, tpu.core_type = #tpu.core_type<tc>, window_params = [{transform_indices = @transform_0, window_bounds = array<i64: 8, 32>}, {transform_indices = @transform_1, window_bounds = array<i64: 8, 32>}, {transform_indices = @transform_2, window_bounds = array<i64: 1, 1, 1>}]} {
    %c0 = arith.constant 0 : index
    %c0_0 = arith.constant 0 : index
    %0 = vector.load %arg1[%c0, %c0_0] : memref<8x32xf32, #tpu.memory_space<vmem>>, vector<8x32xf32>
    %cst = arith.constant 5.000000e-01 : f32
    %1 = vector.broadcast %cst : f32 to vector<8x32xf32>
    %2 = arith.mulf %0, %1 : vector<8x32xf32>
    %c0_1 = arith.constant 0 : index
    %c0_2 = arith.constant 0 : index
    %3 = vector.load %arg2[%c0_1, %c0_2] : memref<8x32xf32, #tpu.memory_space<vmem>>, vector<8x32xf32>
    %cst_3 = arith.constant 5.000000e-01 : f32
    %4 = vector.broadcast %cst_3 : f32 to vector<8x32xf32>
    %5 = arith.mulf %3, %4 : vector<8x32xf32>
    %c8_i32 = arith.constant 8 : i32
    %6 = arith.muli %arg0, %c8_i32 : i32
    %7 = tpu.iota {dimensions = array<i32: 0>} : vector<8x1xi32>
    %8 = vector.broadcast %6 : i32 to vector<8x1xi32>
    %9 = arith.addi %8, %7 : vector<8x1xi32>
    %c4_i32 = arith.constant 4 : i32
    %10 = vector.broadcast %c4_i32 : i32 to vector<8x1xi32>
    %11 = arith.cmpi slt, %9, %10 : vector<8x1xi32>
    %cst_4 = arith.constant 0.000000e+00 : f32
    %12 = vector.shape_cast %11 : vector<8x1xi1> to vector<8x1xi1>
    %13 = vector.broadcast %12 : vector<8x1xi1> to vector<8x32xi1>
    %14 = vector.broadcast %cst_4 : f32 to vector<8x32xf32>
    %15 = arith.select %13, %2, %14 : vector<8x32xi1>, vector<8x32xf32>
    %cst_5 = arith.constant 0.000000e+00 : f32
    %16 = vector.shape_cast %11 : vector<8x1xi1> to vector<8x1xi1>
    %17 = vector.broadcast %16 : vector<8x1xi1> to vector<8x32xi1>
    %18 = vector.broadcast %cst_5 : f32 to vector<8x32xf32>
    %19 = arith.select %17, %5, %18 : vector<8x32xi1>, vector<8x32xf32>
    %20 = arith.addf %15, %19 : vector<8x32xf32>
    %cst_6 = arith.constant 5.000000e-01 : f32
    %21 = vector.broadcast %cst_6 : f32 to vector<8x32xf32>
    %22 = arith.mulf %21, %20 : vector<8x32xf32>
    %cst_7 = arith.constant dense<0xFF800000> : vector<8xf32>
    %23 = vector.multi_reduction <maximumf>, %15, %cst_7 [1] : vector<8x32xf32> to vector<8xf32>
    %24 = vector.shape_cast %23 : vector<8xf32> to vector<8x1xf32>
    %25 = vector.broadcast %24 : vector<8x1xf32> to vector<8x32xf32>
    %26 = arith.subf %15, %25 : vector<8x32xf32>
    %27 = math.exp %26 : vector<8x32xf32>
    %cst_8 = arith.constant dense<0.000000e+00> : vector<8xf32>
    %28 = vector.multi_reduction <add>, %27, %cst_8 [1] : vector<8x32xf32> to vector<8xf32>
    %29 = vector.shape_cast %28 : vector<8xf32> to vector<8x1xf32>
    %30 = math.log %29 : vector<8x1xf32>
    %31 = arith.addf %24, %30 : vector<8x1xf32>
    %cst_9 = arith.constant dense<0xFF800000> : vector<8xf32>
    %32 = vector.multi_reduction <maximumf>, %19, %cst_9 [1] : vector<8x32xf32> to vector<8xf32>
    %33 = vector.shape_cast %32 : vector<8xf32> to vector<8x1xf32>
    %34 = vector.broadcast %33 : vector<8x1xf32> to vector<8x32xf32>
    %35 = arith.subf %19, %34 : vector<8x32xf32>
    %36 = math.exp %35 : vector<8x32xf32>
    %cst_10 = arith.constant dense<0.000000e+00> : vector<8xf32>
    %37 = vector.multi_reduction <add>, %36, %cst_10 [1] : vector<8x32xf32> to vector<8xf32>
    %38 = vector.shape_cast %37 : vector<8xf32> to vector<8x1xf32>
    %39 = math.log %38 : vector<8x1xf32>
    %40 = arith.addf %33, %39 : vector<8x1xf32>
    %41 = arith.addf %31, %40 : vector<8x1xf32>
    %cst_11 = arith.constant dense<0xFF800000> : vector<8xf32>
    %42 = vector.multi_reduction <maximumf>, %22, %cst_11 [1] : vector<8x32xf32> to vector<8xf32>
    %43 = vector.shape_cast %42 : vector<8xf32> to vector<8x1xf32>
    %44 = vector.broadcast %43 : vector<8x1xf32> to vector<8x32xf32>
    %45 = arith.subf %22, %44 : vector<8x32xf32>
    %46 = math.exp %45 : vector<8x32xf32>
    %cst_12 = arith.constant dense<0.000000e+00> : vector<8xf32>
    %47 = vector.multi_reduction <add>, %46, %cst_12 [1] : vector<8x32xf32> to vector<8xf32>
    %48 = vector.shape_cast %47 : vector<8xf32> to vector<8x1xf32>
    %49 = math.log %48 : vector<8x1xf32>
    %50 = arith.addf %43, %49 : vector<8x1xf32>
    %cst_13 = arith.constant 2.000000e+00 : f32
    %51 = vector.broadcast %cst_13 : f32 to vector<8x1xf32>
    %52 = arith.mulf %51, %50 : vector<8x1xf32>
    %53 = arith.subf %41, %52 : vector<8x1xf32>
    %54 = vector.shape_cast %53 : vector<8x1xf32> to vector<1x8x1xf32>
    %cst_14 = arith.constant dense<0.000000e+00> : vector<1xf32>
    %55 = vector.multi_reduction <add>, %54, %cst_14 [1, 2] : vector<1x8x1xf32> to vector<1xf32>
    %56 = vector.shape_cast %55 : vector<1xf32> to vector<1x1x1xf32>
    %57 = vector.extract %56[0, 0, 0] : f32 from vector<1x1x1xf32>
    %58 = vector.broadcast %57 : f32 to vector<1x1xf32>
    %59 = vector.shape_cast %58 : vector<1x1xf32> to vector<1x1x1xf32>
    %c0_15 = arith.constant 0 : index
    %c0_16 = arith.constant 0 : index
    %c0_17 = arith.constant 0 : index
    %60 = vector.load %arg3[%c0_15, %c0_16, %c0_17] : memref<1x1x1xf32, #tpu.memory_space<vmem>>, vector<1x1x1xf32>
    tpu.vector_store %arg3[%c0_15, %c0_16, %c0_17], %59 {strides = array<i32>} : memref<1x1x1xf32, #tpu.memory_space<vmem>>, vector<1x1x1xf32>,
    return
  }
  func.func @transform_0(%arg0: i32) -> (i32, i32) {
    %c0_i32 = arith.constant 0 : i32
    %c0_i32_0 = arith.constant 0 : i32
    return %arg0, %c0_i32 : i32, i32
  }
  func.func @transform_1(%arg0: i32) -> (i32, i32) {
    %c0_i32 = arith.constant 0 : i32
    %c0_i32_0 = arith.constant 0 : i32
    return %arg0, %c0_i32 : i32, i32
  }
  func.func @transform_2(%arg0: i32) -> (i32, i32, i32) {
    %c0_i32 = arith.constant 0 : i32
    %c0_i32_0 = arith.constant 0 : i32
    %c0_i32_1 = arith.constant 0 : i32
    return %arg0, %c0_i32, %c0_i32_0 : i32, i32, i32
  }
}

</mosaic_0001>

<llo_original>
// kernel: tpu_custom_call.1
$region0: #{tpu_custom_call.1}
  #allocation0 [shape = 'u32[]', space=smem, size = 0x4, offset = 0x4, fixed_abs, tag = 'smem constant byte address 0x4 - core index']
  #allocation1 [shape = 'u32[144,128]{1,0:T(1,128)}', space=vmem, size = 0x12000, scoped, tag = 'internal scratch']
  %s0 = inlined_call_operand.hbm [shape: f32[4,32], index: 0, kind: input, shape index: {}]
  %s1 = inlined_call_operand.hbm [shape: f32[4,32], index: 1, kind: input, shape index: {}]
  %s2 = inlined_call_operand.hbm [shape: f32[1,1,1], index: 2, kind: output, shape index: {}]
  %s3 = sld [smem:[#allocation0]]
  $region26: #{tpu_custom_call.1} parent=0
    _
  %s5 = ssub.s32 1, %s3
  %s6 = scalar_select 0, %s5, %s3
  $region1: #{tpu_custom_call.1} parent=0
    #allocation2 [shape = 'u8[4096]{0}', space=vmem, size = 0x1000, scoped, tag = 'input window, operand 0, single buffered']
    #allocation3 [shape = 's32[1]{0}', space=sflag, size = 0x4, scoped, tag = 'scoped memory for tpu_custom_call.1']
    #allocation4 [shape = 's32[1]{0}', space=sflag, size = 0x4, scoped, tag = 'scoped memory for tpu_custom_call.1']
    #allocation5 [shape = 'u8[4096]{0}', space=vmem, size = 0x1000, scoped, tag = 'input window, operand 1, single buffered']
    #allocation6 [shape = 's32[1]{0}', space=sflag, size = 0x4, scoped, tag = 'scoped memory for tpu_custom_call.1']
    #allocation7 [shape = 'u8[512]{0}', space=vmem, size = 0x400, scoped, tag = 'output window, operand 0, single buffered']
    %7 = vsyncpa [#allocation3], 0
    %8 = vsyncpa [#allocation6], 0
    %9 = vsyncpa [#allocation4], 0
    // Predicated region
    $region2: #{tpu_custom_call.1} parent=1 // pred_check
      _
    $region3: #{tpu_custom_call.1} parent=1 // pred_check_branch
      %11 = sbr.rel (0) target = $region5
    $region4: #{tpu_custom_call.1} parent=1 // pred_region
      %s13 = ssub.s32 128, 64
      %14 = vsyncadd [#allocation3], %s13
      %s15 = sshll.u32 [#allocation2], 4
      %s16 = int_to_ptr.vmem [resolvable:$true] %s15
      %21 = dma.hbm_to_vmem [thread:$0]  %s0, 64, %s16, [#allocation3], 64, 64, 4
    $region5: #{tpu_custom_call.1} parent=1 // pred_fallthru
      _
    // Predicated region
    $region6: #{tpu_custom_call.1} parent=1 // pred_check
      _
    $region7: #{tpu_custom_call.1} parent=1 // pred_check_branch
      %23 = sbr.rel (0) target = $region9
    $region8: #{tpu_custom_call.1} parent=1 // pred_region
      %s25 = ssub.s32 128, 64
      %26 = vsyncadd [#allocation6], %s25
      %s27 = sshll.u32 [#allocation5], 4
      %s28 = int_to_ptr.vmem [resolvable:$true] %s27
      %33 = dma.hbm_to_vmem [thread:$0]  %s1, 64, %s28, [#allocation6], 64, 64, 4
    $region9: #{tpu_custom_call.1} parent=1 // pred_fallthru
      _
    // Predicated region
    $region10: #{tpu_custom_call.1} parent=1 // pred_check
      _
    $region11: #{tpu_custom_call.1} parent=1 // pred_check_branch
      %35 = sbr.rel (0) target = $region13
    $region12: #{tpu_custom_call.1} parent=1 // pred_region
      %36 = dma.done [#allocation3], 128
    $region13: #{tpu_custom_call.1} parent=1 // pred_fallthru
      _
    // Predicated region
    $region14: #{tpu_custom_call.1} parent=1 // pred_check
      _
    $region15: #{tpu_custom_call.1} parent=1 // pred_check_branch
      %38 = sbr.rel (0) target = $region17
    $region16: #{tpu_custom_call.1} parent=1 // pred_region
      %39 = dma.done [#allocation6], 128
    $region17: #{tpu_custom_call.1} parent=1 // pred_fallthru
      _
    %v40 = vld [vmem:[#allocation2] sm:$0xff]
    %v41 = vmul.f32 %v40, 0.5
    %v42 = vld [vmem:[#allocation5] sm:$0xff]
    %v43 = vmul.f32 %v42, 0.5
    %s44 = smul.u32 0, 8
    %v45 = vlaneseq
    %v46 = vshrl.u32 %v45, 7
    %v47 = vstv %s44
    %v48 = vadd.s32 %v47, %v46
    %vm49 = vcmp.lt.s32.totalorder %v48, 4
    %v50 = vsel %vm49, 1, 0
    %vm51 = vcmp.eq.s32.totalorder %v50, 1
    %v52 = vsel %vm51, %v41, 0.0
    %v53 = vsel %vm51, %v43, 0.0
    %v54 = vadd.f32 %v52, %v53
    %v55 = vmul.f32 %v54, 0.5
    %vm56 = vcmask 261120
    %v57 = vsel %vm56, %v52, -inf
    %58 = vmax.xlane.f32.xlu0 %v57
    %v59 = vpop.xlane.xlu0 %58
    %v60 = vsub.f32 %v52, %v59
    %v61 = vmul.f32 %v60, 1.442695
    %v62 = vpow.pop %v61
    %v63 = vsel %vm56, %v62, 0.0
    %64 = vadd.xlane.f32.xlu0 %v63
    %v65 = vpop.xlane.xlu0 %64
    %v66 = vlog2.pop %v65
    %v67 = vmul.f32 %v66, 0.6931472
    %v68 = vadd.f32 %v59, %v67
    %v69 = vsel %vm56, %v53, -inf
    %70 = vmax.xlane.f32.xlu0 %v69
    %v71 = vpop.xlane.xlu0 %70
    %v72 = vsub.f32 %v53, %v71
    %v73 = vmul.f32 %v72, 1.442695
    %v74 = vpow.pop %v73
    %v75 = vsel %vm56, %v74, 0.0
    %76 = vadd.xlane.f32.xlu0 %v75
    %v77 = vpop.xlane.xlu0 %76
    %v78 = vlog2.pop %v77
    %v79 = vmul.f32 %v78, 0.6931472
    %v80 = vadd.f32 %v71, %v79
    %v81 = vadd.f32 %v68, %v80
    %v82 = vsel %vm56, %v55, -inf
    %83 = vmax.xlane.f32.xlu0 %v82
    %v84 = vpop.xlane.xlu0 %83
    %v85 = vsub.f32 %v55, %v84
    %v86 = vmul.f32 %v85, 1.442695
    %v87 = vpow.pop %v86
    %v88 = vsel %vm56, %v87, 0.0
    %89 = vadd.xlane.f32.xlu0 %v88
    %v90 = vpop.xlane.xlu0 %89
    %v91 = vlog2.pop %v90
    %v92 = vmul.f32 %v91, 0.6931472
    %v93 = vadd.f32 %v84, %v92
    %v94 = vmul.f32 %v93, 2.0
    %v95 = vsub.f32 %v81, %v94
    %vm96 = vcmask 7168
    %v97 = vsel %vm96, %v95, 0.0
    %98 = vadd.xlane.f32.xlu0 %v97
    %v99 = vpop.xlane.xlu0 %98
    %v100 = vrot.slane %v99, 4
    %v101 = vadd.f32 %v99, %v100
    %v102 = vrot.slane %v101, 2
    %v103 = vadd.f32 %v101, %v102
    %v104 = vrot.slane %v103, 1
    %v105 = vadd.f32 %v103, %v104
    %s106 = vtos %v105
    %v107 = vstv %s106
    %vm108 = vcmask 0
    %109 = vst.msk [vmem:[#allocation7] sm:$0x1] %vm108, %v107
    // Predicated region
    $region18: #{tpu_custom_call.1} parent=1 // pred_check
      _
    $region19: #{tpu_custom_call.1} parent=1 // pred_check_branch
      %111 = sbr.rel (0) target = $region21
    $region20: #{tpu_custom_call.1} parent=1 // pred_region
      %s113 = ssub.s32 16, 16
      %114 = vsyncadd [#allocation4], %s113
      %s116 = sshll.u32 [#allocation7], 4
      %s117 = int_to_ptr.vmem [resolvable:$true] %s116
      %119 = dma.vmem_to_hbm [thread:$0]  %s117, 16, %s2, [#allocation4]
    $region21: #{tpu_custom_call.1} parent=1 // pred_fallthru
      _
    // Predicated region
    $region22: #{tpu_custom_call.1} parent=1 // pred_check
      _
    $region23: #{tpu_custom_call.1} parent=1 // pred_check_branch
      %121 = sbr.rel (0) target = $region25
    $region24: #{tpu_custom_call.1} parent=1 // pred_region
      %122 = dma.done [#allocation4], 16
    $region25: #{tpu_custom_call.1} parent=1 // pred_fallthru
      _
    %123 = vsyncpa [#allocation3], 1
    %124 = vsyncpa [#allocation6], 1
    %125 = vsyncpa [#allocation4], 1

</llo_original>
